<compile_context>
chip_gen: v6e
topology: v6e:2x2x1
jax: 0.10.0
libtpu: 0.0.40
codegen_flags: <defaults>
</compile_context>

<pallas_src>
import jax
import jax.numpy as jnp
from jax.experimental import pallas as pl
from jax.experimental.pallas import tpu as pltpu


def _round_up(n, m):
    return (n + m - 1) // m * m


def _softmax_rows_kernel(o_ref, w_ref):
    """Numerically-stable softmax over the last axis of a small (R, K) tile."""
    o = o_ref[...].astype(jnp.float32)
    m = jnp.max(o, axis=1, keepdims=True)
    e = jnp.exp(o - m)
    # Exact reciprocal: this runs once per call on an (R, 1) column, so the
    # refinement cost is negligible and keeps tight parity with the reference.
    w_ref[...] = e * pl.reciprocal(jnp.sum(e, axis=1, keepdims=True), approx=False)


def _weighted_reduce_kernel(x_ref, wbig_ref, out_ref):
    """out[b, r] = sum_k x[b, r*K + k] * w[r, k] via one lane-dense MXU matmul."""
    x = x_ref[...]                       # (TB, R*K), lane-dense batch tile
    w_big = wbig_ref[...]                # (R*K, R) block-diagonal f32 weights
    if x.dtype == jnp.float32:
        acc = jnp.dot(x, w_big, preferred_element_type=jnp.float32)
    else:
        # Low-precision inputs (e.g. bf16): native MXU pass, f32 accumulation,
        # without materializing an f32 copy of the tile.
        acc = jnp.dot(x, w_big.astype(x.dtype), preferred_element_type=jnp.float32)
    out_ref[...] = acc.astype(out_ref.dtype)


def softmax_weights(o_mat):
    """softmax(O_mat, axis=1), computed once per call in a tiny Pallas kernel."""
    R, K = o_mat.shape
    return pl.pallas_call(
        _softmax_rows_kernel,
        out_shape=jax.ShapeDtypeStruct((R, K), jnp.float32),
        in_specs=[pl.BlockSpec((R, K), lambda: (0, 0))],
        out_specs=pl.BlockSpec((R, K), lambda: (0, 0)),
    )(o_mat)


def operation_softmax_weight(x, o_mat, *, target_block_bytes=2 * 1024 * 1024):
    """x: (B, R, K), o_mat: (R, K) -> (B, R)."""
    B, R, K = x.shape
    assert o_mat.shape == (R, K)
    RK = R * K

    # --- once-per-call preamble (hoisted out of the batch loop) --------------
    w = softmax_weights(o_mat)                                     # (R, K) f32
    # Scatter the weights block-diagonally so the segmented reduce over K is a
    # single matmul.  Layout plumbing only, done once outside the hot loop.
    w_big = (w[:, :, None] * jnp.eye(R, dtype=jnp.float32)[:, None, :]).reshape(RK, R)

    # --- batch-gridded, double-buffered main kernel --------------------------
    x_flat = x.reshape(B, RK)                                      # contiguous
    bytes_per_row = RK * x_flat.dtype.itemsize
    tb = int(target_block_bytes // max(bytes_per_row, 1))
    tb = max(8, min((tb // 8) * 8, 1024))          # multiple of 8, clamped
    tb = min(tb, _round_up(B, 8))
    b_pad = _round_up(B, tb)
    if b_pad != B:
        x_flat = jnp.pad(x_flat, ((0, b_pad - B), (0, 0)))

    out = pl.pallas_call(
        _weighted_reduce_kernel,
        out_shape=jax.ShapeDtypeStruct((b_pad, R), x.dtype),
        grid_spec=pltpu.PrefetchScalarGridSpec(
            num_scalar_prefetch=0,
            grid=(b_pad // tb,),
            in_specs=[
                pl.BlockSpec((tb, RK), lambda i: (i, 0)),   # batch tile (pipelined)
                pl.BlockSpec((RK, R), lambda i: (0, 0)),    # weights, VMEM-resident
            ],
            out_specs=pl.BlockSpec((tb, R), lambda i: (i, 0)),
        ),
        compiler_params=pltpu.CompilerParams(
            dimension_semantics=("parallel",),  # shard batch grid on v7x's 2 TCs
        ),
    )(x_flat, w_big)
    return out[:B]


def _reference(x, o_mat):
    w = jax.nn.softmax(o_mat.astype(jnp.float32), axis=1)
    return jnp.sum(x.astype(jnp.float32) * w[None, :, :], axis=-1).astype(x.dtype)


if __name__ == "__main__":
    key = jax.random.PRNGKey(0)
    kx, ko, kx2, ko2 = jax.random.split(key, 4)

    # Generic shapes (same family as the previous iteration).
    B, R, K = 10, 16, 32
    x = jax.random.normal(kx, (B, R, K), dtype=jnp.float32)
    o_mat = jax.random.normal(ko, (R, K), dtype=jnp.float32)
    ref = _reference(x, o_mat)

    # Tolerance 1e-4: MXU f32 accumulation order / multi-pass differs slightly
    # from the VPU-summed reference.
    out = operation_softmax_weight(x, o_mat)               # single batch tile
    jax.block_until_ready(out)
    assert out.shape == (B, R)
    assert jnp.allclose(out, ref, atol=1e-4, rtol=1e-4), "mismatch (default tiling)"

    # Force several grid steps (+ batch padding) to exercise the pipeline path.
    out_tiled = operation_softmax_weight(x, o_mat, target_block_bytes=16 * 1024)
    jax.block_until_ready(out_tiled)
    assert jnp.allclose(out_tiled, ref, atol=1e-4, rtol=1e-4), "mismatch (tiled)"

    # Shapes matching mod_UNIQUAC's actual operationLayer call: K == 2 ops.
    B2, R2, K2 = 10, 16, 2
    x2 = jax.random.normal(kx2, (B2, R2, K2), dtype=jnp.float32)
    o2 = jax.random.normal(ko2, (R2, K2), dtype=jnp.float32)
    out2 = operation_softmax_weight(x2, o2)
    jax.block_until_ready(out2)
    assert jnp.allclose(out2, _reference(x2, o2), atol=1e-4, rtol=1e-4), "mismatch (K=2)"

    print("KERNEL_OK")
</pallas_src>

<mosaic_0001>
module attributes {stable_mosaic.version = 11 : i64} {
  func.func @_softmax_rows_kernel(%arg0: memref<16x32xf32, #tpu.memory_space<vmem>>, %arg1: memref<16x32xf32, #tpu.memory_space<vmem>>) attributes {dimension_semantics = [], scalar_prefetch = 0 : i64, scratch_operands = 0 : i64, tpu.core_type = #tpu.core_type<tc>} {
    %c0 = arith.constant 0 : index
    %c0_0 = arith.constant 0 : index
    %0 = vector.load %arg0[%c0, %c0_0] : memref<16x32xf32, #tpu.memory_space<vmem>>, vector<16x32xf32>
    %cst = arith.constant dense<0xFF800000> : vector<16xf32>
    %1 = vector.multi_reduction <maximumf>, %0, %cst [1] : vector<16x32xf32> to vector<16xf32>
    %2 = vector.shape_cast %1 : vector<16xf32> to vector<16x1xf32>
    %3 = vector.broadcast %2 : vector<16x1xf32> to vector<16x32xf32>
    %4 = arith.subf %0, %3 : vector<16x32xf32>
    %5 = math.exp %4 : vector<16x32xf32>
    %cst_1 = arith.constant dense<0.000000e+00> : vector<16xf32>
    %6 = vector.multi_reduction <add>, %5, %cst_1 [1] : vector<16x32xf32> to vector<16xf32>
    %7 = vector.shape_cast %6 : vector<16xf32> to vector<16x1xf32>
    %8 = tpu.reciprocal %7 : vector<16x1xf32> -> vector<16x1xf32>
    %9 = vector.broadcast %8 : vector<16x1xf32> to vector<16x32xf32>
    %10 = arith.mulf %5, %9 : vector<16x32xf32>
    %c0_2 = arith.constant 0 : index
    %c0_3 = arith.constant 0 : index
    %11 = vector.load %arg1[%c0_2, %c0_3] : memref<16x32xf32, #tpu.memory_space<vmem>>, vector<16x32xf32>
    tpu.vector_store %arg1[%c0_2, %c0_3], %10 {strides = array<i32>} : memref<16x32xf32, #tpu.memory_space<vmem>>, vector<16x32xf32>,
    return
  }
}

</mosaic_0001>

<llo_original>
// kernel: tpu_custom_call.1
$region0: #{tpu_custom_call.1}
  #allocation0 [shape = 'u32[]', space=smem, size = 0x4, offset = 0x4, fixed_abs, tag = 'smem constant byte address 0x4 - core index']
  #allocation1 [shape = 'u32[144,128]{1,0:T(1,128)}', space=vmem, size = 0x12000, scoped, tag = 'internal scratch']
  %s0 = inlined_call_operand.hbm [shape: f32[16,32], index: 0, kind: input, shape index: {}]
  %s1 = inlined_call_operand.hbm [shape: f32[16,32], index: 1, kind: output, shape index: {}]
  %s2 = sld [smem:[#allocation0]]
  $region18: #{tpu_custom_call.1} parent=0
    _
  %s4 = ssub.s32 1, %s2
  %s5 = scalar_select 0, %s4, %s2
  $region1: #{tpu_custom_call.1} parent=0
    #allocation2 [shape = 'u8[8192]{0}', space=vmem, size = 0x2000, scoped, tag = 'input window, operand 0, single buffered']
    #allocation3 [shape = 's32[1]{0}', space=sflag, size = 0x4, scoped, tag = 'scoped memory for tpu_custom_call.1']
    #allocation4 [shape = 's32[1]{0}', space=sflag, size = 0x4, scoped, tag = 'scoped memory for tpu_custom_call.1']
    #allocation5 [shape = 'u8[8192]{0}', space=vmem, size = 0x2000, scoped, tag = 'output window, operand 0, single buffered']
    %6 = vsyncpa [#allocation3], 0
    %7 = vsyncpa [#allocation4], 0
    // Predicated region
    $region2: #{tpu_custom_call.1} parent=1 // pred_check
      _
    $region3: #{tpu_custom_call.1} parent=1 // pred_check_branch
      %9 = sbr.rel (0) target = $region5
    $region4: #{tpu_custom_call.1} parent=1 // pred_region
      %s11 = ssub.s32 256, 256
      %12 = vsyncadd [#allocation3], %s11
      %s13 = sshll.u32 [#allocation2], 4
      %s14 = int_to_ptr.vmem [resolvable:$true] %s13
      %19 = dma.hbm_to_vmem [thread:$0]  %s0, 256, %s14, [#allocation3], 128, 128, 8
    $region5: #{tpu_custom_call.1} parent=1 // pred_fallthru
      _
    // Predicated region
    $region6: #{tpu_custom_call.1} parent=1 // pred_check
      _
    $region7: #{tpu_custom_call.1} parent=1 // pred_check_branch
      %21 = sbr.rel (0) target = $region9
    $region8: #{tpu_custom_call.1} parent=1 // pred_region
      %22 = dma.done [#allocation3], 256
    $region9: #{tpu_custom_call.1} parent=1 // pred_fallthru
      _
    %v23 = vld [vmem:[#allocation2] sm:$0xff]
    %v24 = vld [vmem:[#allocation2 + $0x8] sm:$0xff]
    %vm25 = vcmask 261120
    %v26 = vsel %vm25, %v23, -inf
    %27 = vmax.xlane.f32.xlu0 %v26
    %v28 = vpop.xlane.xlu0 %27
    %v29 = vsel %vm25, %v24, -inf
    %30 = vmax.xlane.f32.xlu0 %v29
    %v31 = vpop.xlane.xlu0 %30
    %v32 = vsub.f32 %v23, %v28
    %v33 = vsub.f32 %v24, %v31
    %v34 = vmul.f32 %v32, 1.442695
    %v35 = vpow.pop %v34
    %v36 = vmul.f32 %v33, 1.442695
    %v37 = vpow.pop %v36
    %v38 = vsel %vm25, %v35, 0.0
    %39 = vadd.xlane.f32.xlu0 %v38
    %v40 = vpop.xlane.xlu0 %39
    %v41 = vsel %vm25, %v37, 0.0
    %42 = vadd.xlane.f32.xlu0 %v41
    %v43 = vpop.xlane.xlu0 %42
    %v44 = vrcp.pop %v40
    %v45 = vrcp.pop %v43
    %v46 = vmul.f32 %v35, %v44
    %v47 = vmul.f32 %v37, %v45
    %48 = vst.msk [vmem:[#allocation5] sm:$0xff] %vm25, %v46
    %49 = vst.msk [vmem:[#allocation5 + $0x8] sm:$0xff] %vm25, %v47
    // Predicated region
    $region10: #{tpu_custom_call.1} parent=1 // pred_check
      _
    $region11: #{tpu_custom_call.1} parent=1 // pred_check_branch
      %51 = sbr.rel (0) target = $region13
    $region12: #{tpu_custom_call.1} parent=1 // pred_region
      %s53 = ssub.s32 256, 256
      %54 = vsyncadd [#allocation4], %s53
      %s55 = sshll.u32 [#allocation5], 4
      %s56 = int_to_ptr.vmem [resolvable:$true] %s55
      %61 = dma.vmem_to_hbm [thread:$0]  %s56, 256, %s1, [#allocation4], 128, 128, 8
    $region13: #{tpu_custom_call.1} parent=1 // pred_fallthru
      _
    // Predicated region
    $region14: #{tpu_custom_call.1} parent=1 // pred_check
      _
    $region15: #{tpu_custom_call.1} parent=1 // pred_check_branch
      %63 = sbr.rel (0) target = $region17
    $region16: #{tpu_custom_call.1} parent=1 // pred_region
      %64 = dma.done [#allocation4], 256
    $region17: #{tpu_custom_call.1} parent=1 // pred_fallthru
      _
    %65 = vsyncpa [#allocation3], 1
    %66 = vsyncpa [#allocation4], 1

</llo_original>
